<compile_context>
chip_gen: v7x
topology: tpu7x:2x2x1
jax: 0.10.0
libtpu: 0.0.40
codegen_flags: <defaults>
</compile_context>

<pallas_src>
from typing import NamedTuple

import numpy as np

import jax
import jax.numpy as jnp
from jax.experimental import pallas as pl
from jax.experimental.pallas import tpu as pltpu


def _round_up(x, m):
    return ((x + m - 1) // m) * m


class GCNGraph(NamedTuple):
    """Static, pre-padded graph data prepared once per graph (host-side)."""
    adjT: jnp.ndarray        # [N_pad_m, N_pad_k] int8, A^T[v, u] = #edges u->v
    inv_degs: jnp.ndarray    # [N_pad_m, 1] f32, 1/(in_deg+1), 0 on padded rows
    ktile_ids: jnp.ndarray   # [num_i, max_k] int32, compacted nonzero k-tiles per row tile
    ktile_cnt: jnp.ndarray   # [num_i] int32, number of valid entries per row tile
    num_nodes: int
    tm: int
    tk: int
    n_pad_m: int
    n_pad_k: int
    nnz_tiles: int


def prepare_graph(src, dst, num_nodes, *, tm=512, tk=512):
    """One-time (per static graph) preparation: densify A^T as int8, pad it to
    tile multiples, compute 1/(deg+1), and build the block-sparsity metadata."""
    src = np.asarray(src)
    dst = np.asarray(dst)
    N = int(num_nodes)

    # int8 adjacency blocks need (32, 128)-aligned tiles; pad rows/cols independently.
    tm = _round_up(min(tm, _round_up(N, 32)), 32)
    tk = _round_up(min(tk, _round_up(N, 128)), 128)
    n_pad_m = _round_up(N, tm)
    n_pad_k = _round_up(N, tk)
    num_i = n_pad_m // tm
    num_k = n_pad_k // tk

    adjT = np.zeros((n_pad_m, n_pad_k), np.int8)          # edge multiplicities (<=127)
    np.add.at(adjT, (dst, src), 1)

    in_degs = np.zeros((N,), np.float64)
    np.add.at(in_degs, dst, 1.0)
    inv_degs = np.zeros((n_pad_m, 1), np.float32)
    inv_degs[:N, 0] = (1.0 / (in_degs + 1.0)).astype(np.float32)

    # Per-row-tile compacted list of nonzero (tm, tk) adjacency tiles.
    occ = adjT.reshape(num_i, tm, num_k, tk).any(axis=(1, 3))     # [num_i, num_k]
    cnt = occ.sum(axis=1).astype(np.int32)
    nnz_tiles = int(occ.sum())
    max_k = max(1, int(cnt.max()) if cnt.size else 1)
    ktiles = np.zeros((num_i, max_k), np.int32)
    for i in range(num_i):
        nz = np.nonzero(occ[i])[0].astype(np.int32)
        if nz.size:
            ktiles[i, :nz.size] = nz
            ktiles[i, nz.size:] = nz[-1]   # repeat last valid tile: no extra DMA, dot skipped

    return GCNGraph(
        adjT=jnp.asarray(adjT),
        inv_degs=jnp.asarray(inv_degs),
        ktile_ids=jnp.asarray(ktiles),
        ktile_cnt=jnp.asarray(cnt),
        num_nodes=N, tm=tm, tk=tk,
        n_pad_m=n_pad_m, n_pad_k=n_pad_k, nnz_tiles=nnz_tiles,
    )


def _gcn_kernel(ktile_ref, kcnt_ref,                       # scalar-prefetch (SMEM)
                adjT_ref, nfeat_ref, selfagg_ref, invdeg_ref, w_ref, b_ref,
                out_ref, acc_ref):
    i = pl.program_id(0)
    k = pl.program_id(1)

    @pl.when(k == 0)
    def _():
        # acc starts at nfeat + edge_agg (saves an add + VMEM read in finalize).
        acc_ref[...] = selfagg_ref[...]

    @pl.when(k < kcnt_ref[i])
    def _():
        # neigh(row tile) += A^T(row tile, k-tile) @ nfeat(k-tile)
        # int8 -> bf16 upcast on the VPU (free while mem-bound), f32 MXU accumulation.
        a = adjT_ref[...].astype(jnp.bfloat16)
        acc_ref[...] += jnp.dot(a, nfeat_ref[...], preferred_element_type=jnp.float32)

    @pl.when(k == pl.num_programs(1) - 1)
    def _():
        # h = (nfeat + neigh + edge_agg) / degs ; project: h @ W^T + b (bf16 MXU, f32 acc)
        h = (acc_ref[...] * invdeg_ref[...]).astype(jnp.bfloat16)
        out = jnp.dot(h, w_ref[...], preferred_element_type=jnp.float32) + b_ref[...]
        out_ref[...] = out.astype(out_ref.dtype)


def gcn_conv_layer(graph: GCNGraph, nfeat, self_edge_agg, w_t, bias):
    """graph: prepare_graph(...) output. nfeat: [N, D] node features.
    self_edge_agg: [N, D] = nfeat + segment_sum(edge_feat, dst).
    w_t: [D, D] = Linear.weight.T.  bias: [D] or [1, D]."""
    N, D = nfeat.shape
    assert N == graph.num_nodes
    tm, tk = graph.tm, graph.tk
    n_pad_m, n_pad_k = graph.n_pad_m, graph.n_pad_k
    D_pad = max(128, _round_up(D, 128))
    num_i = n_pad_m // tm
    max_k = graph.ktile_ids.shape[1]

    def pad2(x, r, c):
        return jnp.pad(x, ((0, r - x.shape[0]), (0, c - x.shape[1])))

    nfeat_p = pad2(nfeat, n_pad_k, D_pad).astype(jnp.bfloat16)
    selfagg_p = pad2(self_edge_agg, n_pad_m, D_pad).astype(jnp.float32)
    w_p = pad2(w_t, D_pad, D_pad).astype(jnp.bfloat16)
    b_p = pad2(jnp.reshape(bias, (1, D)), 1, D_pad).astype(jnp.float32)

    grid = (num_i, max_k)

    # Advisory cost estimate (block-sparse byte/flop counts).
    flops = 2 * graph.nnz_tiles * tm * tk * D_pad + 2 * n_pad_m * D_pad * D_pad
    bytes_accessed = (graph.nnz_tiles * (tm * tk * 1 + tk * D_pad * 2)   # adjT int8 + nfeat bf16
                      + n_pad_m * D_pad * 4 * 2                          # selfagg in + out f32
                      + n_pad_m * 4 + D_pad * D_pad * 2 + D_pad * 4)

    out_p = pl.pallas_call(
        _gcn_kernel,
        out_shape=jax.ShapeDtypeStruct((n_pad_m, D_pad), jnp.float32),
        grid_spec=pltpu.PrefetchScalarGridSpec(
            num_scalar_prefetch=2,
            grid=grid,
            in_specs=[
                # adjT tile: data-dependent k-tile index (skips empty tiles entirely)
                pl.BlockSpec((tm, tk), lambda i, k, kt, kc: (i, kt[i, k])),
                # nfeat col tile matching the chosen adjacency k-tile
                pl.BlockSpec((tk, D_pad), lambda i, k, kt, kc: (kt[i, k], 0)),
                # selfagg rows (only consumed at k == 0; same block across k -> one DMA)
                pl.BlockSpec((tm, D_pad), lambda i, k, kt, kc: (i, 0)),
                # 1 / (deg + 1)
                pl.BlockSpec((tm, 1), lambda i, k, kt, kc: (i, 0)),
                # W^T, bias: pinned in VMEM
                pl.BlockSpec((D_pad, D_pad), lambda i, k, kt, kc: (0, 0)),
                pl.BlockSpec((1, D_pad), lambda i, k, kt, kc: (0, 0)),
            ],
            out_specs=pl.BlockSpec((tm, D_pad), lambda i, k, kt, kc: (i, 0)),
            scratch_shapes=[pltpu.VMEM((tm, D_pad), jnp.float32)],
        ),
        compiler_params=pltpu.CompilerParams(
            dimension_semantics=("parallel", "arbitrary"),
            vmem_limit_bytes=32 * 1024 * 1024,
        ),
        cost_estimate=pl.CostEstimate(
            flops=flops, transcendentals=0, bytes_accessed=bytes_accessed),
    )(graph.ktile_ids, graph.ktile_cnt,
      graph.adjT, nfeat_p, selfagg_p, graph.inv_degs, w_p, b_p)

    return out_p[:N, :D]


def ogb_edge_encoder(efeat_int, embed_tables):
    # OGB BondEncoder-style: sum of per-column embedding lookups -> [E, D].
    # Gather stays in plain JAX glue; the hot-path matmuls run in the kernel.
    # TODO(synk): exact OGB_EdgeEncoder definition not available; modeled as embedding-sum.
    out = 0.0
    for col, table in enumerate(embed_tables):
        out = out + table[efeat_int[:, col]]
    return out.astype(jnp.float32)


if __name__ == "__main__":
    key = jax.random.PRNGKey(0)
    N, E, D = 200, 512, 32                     # nodes, edges, embed_dim (small test)
    vocab_sizes = (5, 6, 2)
    num_edge_feat_cols = len(vocab_sizes)

    k_src, k_dst, k_nf, k_ef, k_w, k_b, *k_emb = jax.random.split(
        key, 6 + len(vocab_sizes))

    # Synthetic graph
    src = jax.random.randint(k_src, (E,), 0, N)
    dst = jax.random.randint(k_dst, (E,), 0, N)
    nfeat = jax.random.normal(k_nf, (N, D), dtype=jnp.float32)
    efeat_int = jax.random.randint(k_ef, (E, num_edge_feat_cols), 0, min(vocab_sizes))

    # Deterministic parameters
    embed_tables = [
        0.1 * jax.random.normal(k_emb[i], (vocab_sizes[i], D), dtype=jnp.float32)
        for i in range(len(vocab_sizes))
    ]
    w = jax.random.normal(k_w, (D, D), dtype=jnp.float32) / jnp.sqrt(D)  # nn.Linear weight [out, in]
    b = 0.01 * jax.random.normal(k_b, (D,), dtype=jnp.float32)
    w_t = w.T                                   # kernel computes h @ W^T
    bias = b.reshape(1, D)

    # --- per-graph preparation (hoisted out of the per-call path) ---
    graph = prepare_graph(src, dst, N)          # int8 padded A^T, 1/degs, tile metadata

    # Edge encoder + per-destination edge aggregation (segment-sum glue).
    efeat_proj = ogb_edge_encoder(efeat_int, embed_tables)
    edge_agg = jnp.zeros((N, D), jnp.float32).at[dst].add(efeat_proj)
    self_edge_agg = nfeat + edge_agg            # nfeat + sum_e e  per destination node

    out = gcn_conv_layer(graph, nfeat, self_edge_agg, w_t, bias)
    out = jax.block_until_ready(out)
    assert out.shape == (N, D)

    # Reference mirroring the kernel's dtype strategy (bf16 message passing,
    # bf16 projection, f32 accumulation) -> tight tolerance.
    adjT_f = jnp.zeros((N, N), jnp.float32).at[dst, src].add(1.0)
    in_degs = jnp.zeros((N,), jnp.float32).at[dst].add(1.0)
    inv_degs_ref = (1.0 / (in_degs + 1.0)).reshape(N, 1)
    neigh_bf16 = jnp.dot(adjT_f.astype(jnp.bfloat16), nfeat.astype(jnp.bfloat16),
                         preferred_element_type=jnp.float32)
    h_ref = (neigh_bf16 + self_edge_agg) * inv_degs_ref
    ref = jnp.dot(h_ref.astype(jnp.bfloat16), w_t.astype(jnp.bfloat16),
                  preferred_element_type=jnp.float32) + bias
    assert jnp.allclose(out, ref, atol=2e-2, rtol=2e-2), "mismatch vs bf16 reference"

    # Loose semantic check against the full-f32 formulation of the module.
    ref_f32 = ((adjT_f @ nfeat + self_edge_agg) * inv_degs_ref) @ w_t + bias
    assert jnp.allclose(out, ref_f32, atol=8e-2, rtol=8e-2), "mismatch vs f32 reference"

    print("KERNEL_OK")
</pallas_src>

<mosaic_0001>
module attributes {stable_mosaic.version = 11 : i64} {
  func.func @_gcn_kernel(%arg0: i32, %arg1: i32, %arg2: memref<1x1xi32, #tpu.memory_space<smem>>, %arg3: memref<1xi32, #tpu.memory_space<smem>>, %arg4: memref<224x256xi8, #tpu.memory_space<vmem>>, %arg5: memref<256x128xbf16, #tpu.memory_space<vmem>>, %arg6: memref<224x128xf32, #tpu.memory_space<vmem>>, %arg7: memref<224x1xf32, #tpu.memory_space<vmem>>, %arg8: memref<128x128xbf16, #tpu.memory_space<vmem>>, %arg9: memref<1x128xf32, #tpu.memory_space<vmem>>, %arg10: memref<224x128xf32, #tpu.memory_space<vmem>>, %arg11: memref<224x128xf32, #tpu.memory_space<vmem>>) attributes {dimension_semantics = [#tpu.dimension_semantics<parallel>, #tpu.dimension_semantics<arbitrary>], iteration_bounds = array<i64: 1, 1>, scalar_prefetch = 2 : i64, scratch_operands = 1 : i64, tpu.core_type = #tpu.core_type<tc>, window_params = [{transform_indices = @transform_0, window_bounds = array<i64: 224, 256>}, {transform_indices = @transform_1, window_bounds = array<i64: 256, 128>}, {transform_indices = @transform_2, window_bounds = array<i64: 224, 128>}, {transform_indices = @transform_3, window_bounds = array<i64: 224, 1>}, {pipeline_mode = #tpu.pipeline_mode<synchronous>, transform_indices = @transform_4, window_bounds = array<i64: 128, 128>}, {pipeline_mode = #tpu.pipeline_mode<synchronous>, transform_indices = @transform_5, window_bounds = array<i64: 1, 128>}, {transform_indices = @transform_6, window_bounds = array<i64: 224, 128>}]} {
    %c0_i32 = arith.constant 0 : i32
    %0 = arith.cmpi eq, %arg1, %c0_i32 : i32
    %1 = arith.extui %0 : i1 to i32
    %c0_i32_0 = arith.constant 0 : i32
    %2 = arith.cmpi ne, %1, %c0_i32_0 : i32
    scf.if %2 {
      %c0 = arith.constant 0 : index
      %c0_4 = arith.constant 0 : index
      %11 = vector.load %arg6[%c0, %c0_4] : memref<224x128xf32, #tpu.memory_space<vmem>>, vector<224x128xf32>
      %c0_5 = arith.constant 0 : index
      %c0_6 = arith.constant 0 : index
      %12 = vector.load %arg11[%c0_5, %c0_6] : memref<224x128xf32, #tpu.memory_space<vmem>>, vector<224x128xf32>
      tpu.vector_store %arg11[%c0_5, %c0_6], %11 {strides = array<i32>} : memref<224x128xf32, #tpu.memory_space<vmem>>, vector<224x128xf32>,
    } else {
    }
    %3 = arith.index_cast %arg0 : i32 to index
    %4 = memref.load %arg3[%3] : memref<1xi32, #tpu.memory_space<smem>>
    %5 = arith.cmpi slt, %arg1, %4 : i32
    %6 = arith.extui %5 : i1 to i32
    %c0_i32_1 = arith.constant 0 : i32
    %7 = arith.cmpi ne, %6, %c0_i32_1 : i32
    scf.if %7 {
      %c0 = arith.constant 0 : index
      %c0_4 = arith.constant 0 : index
      %11 = vector.load %arg4[%c0, %c0_4] : memref<224x256xi8, #tpu.memory_space<vmem>>, vector<224x256xi8>
      %12 = arith.sitofp %11 : vector<224x256xi8> to vector<224x256xbf16>
      %c0_5 = arith.constant 0 : index
      %c0_6 = arith.constant 0 : index
      %13 = vector.load %arg11[%c0_5, %c0_6] : memref<224x128xf32, #tpu.memory_space<vmem>>, vector<224x128xf32>
      %c0_7 = arith.constant 0 : index
      %c0_8 = arith.constant 0 : index
      %14 = vector.load %arg5[%c0_7, %c0_8] : memref<256x128xbf16, #tpu.memory_space<vmem>>, vector<256x128xbf16>
      %cst = arith.constant dense<0.000000e+00> : vector<224x128xf32>
      %15 = tpu.matmul %12, %14, %cst {dimension_numbers = #tpu.dot_dimension_numbers<[1], [0], [0], [1], [0, 0, 1, 1], [], []>} : vector<224x256xbf16>, vector<256x128xbf16>, vector<224x128xf32> -> vector<224x128xf32>
      %16 = arith.addf %13, %15 : vector<224x128xf32>
      %c0_9 = arith.constant 0 : index
      %c0_10 = arith.constant 0 : index
      %17 = vector.load %arg11[%c0_9, %c0_10] : memref<224x128xf32, #tpu.memory_space<vmem>>, vector<224x128xf32>
      tpu.vector_store %arg11[%c0_9, %c0_10], %16 {strides = array<i32>} : memref<224x128xf32, #tpu.memory_space<vmem>>, vector<224x128xf32>,
    } else {
    }
    %c0_i32_2 = arith.constant 0 : i32
    %8 = arith.cmpi eq, %arg1, %c0_i32_2 : i32
    %9 = arith.extui %8 : i1 to i32
    %c0_i32_3 = arith.constant 0 : i32
    %10 = arith.cmpi ne, %9, %c0_i32_3 : i32
    scf.if %10 {
      %c0 = arith.constant 0 : index
      %c0_4 = arith.constant 0 : index
      %11 = vector.load %arg11[%c0, %c0_4] : memref<224x128xf32, #tpu.memory_space<vmem>>, vector<224x128xf32>
      %c0_5 = arith.constant 0 : index
      %c0_6 = arith.constant 0 : index
      %12 = vector.load %arg7[%c0_5, %c0_6] : memref<224x1xf32, #tpu.memory_space<vmem>>, vector<224x1xf32>
      %13 = vector.broadcast %12 : vector<224x1xf32> to vector<224x128xf32>
      %14 = arith.mulf %11, %13 : vector<224x128xf32>
      %15 = arith.truncf %14 : vector<224x128xf32> to vector<224x128xbf16>
      %c0_7 = arith.constant 0 : index
      %c0_8 = arith.constant 0 : index
      %16 = vector.load %arg8[%c0_7, %c0_8] : memref<128x128xbf16, #tpu.memory_space<vmem>>, vector<128x128xbf16>
      %cst = arith.constant dense<0.000000e+00> : vector<224x128xf32>
      %17 = tpu.matmul %15, %16, %cst {dimension_numbers = #tpu.dot_dimension_numbers<[1], [0], [0], [1], [0, 0, 1, 1], [], []>} : vector<224x128xbf16>, vector<128x128xbf16>, vector<224x128xf32> -> vector<224x128xf32>
      %c0_9 = arith.constant 0 : index
      %c0_10 = arith.constant 0 : index
      %18 = vector.load %arg9[%c0_9, %c0_10] : memref<1x128xf32, #tpu.memory_space<vmem>>, vector<1x128xf32>
      %19 = vector.broadcast %18 : vector<1x128xf32> to vector<224x128xf32>
      %20 = arith.addf %17, %19 : vector<224x128xf32>
      %c0_11 = arith.constant 0 : index
      %c0_12 = arith.constant 0 : index
      %21 = vector.load %arg10[%c0_11, %c0_12] : memref<224x128xf32, #tpu.memory_space<vmem>>, vector<224x128xf32>
      tpu.vector_store %arg10[%c0_11, %c0_12], %20 {strides = array<i32>} : memref<224x128xf32, #tpu.memory_space<vmem>>, vector<224x128xf32>,
    } else {
    }
    return
  }
  func.func @transform_0(%arg0: i32, %arg1: i32, %arg2: memref<1x1xi32, #tpu.memory_space<smem>>, %arg3: memref<1xi32, #tpu.memory_space<smem>>) -> (i32, i32) {
    %0 = arith.index_cast %arg0 : i32 to index
    %1 = arith.index_cast %arg1 : i32 to index
    %2 = memref.load %arg2[%0, %1] : memref<1x1xi32, #tpu.memory_space<smem>>
    %c0_i32 = arith.constant 0 : i32
    return %arg0, %2 : i32, i32
  }
  func.func @transform_1(%arg0: i32, %arg1: i32, %arg2: memref<1x1xi32, #tpu.memory_space<smem>>, %arg3: memref<1xi32, #tpu.memory_space<smem>>) -> (i32, i32) {
    %0 = arith.index_cast %arg0 : i32 to index
    %1 = arith.index_cast %arg1 : i32 to index
    %2 = memref.load %arg2[%0, %1] : memref<1x1xi32, #tpu.memory_space<smem>>
    %c0_i32 = arith.constant 0 : i32
    %c0_i32_0 = arith.constant 0 : i32
    return %2, %c0_i32 : i32, i32
  }
  func.func @transform_2(%arg0: i32, %arg1: i32, %arg2: memref<1x1xi32, #tpu.memory_space<smem>>, %arg3: memref<1xi32, #tpu.memory_space<smem>>) -> (i32, i32) {
    %c0_i32 = arith.constant 0 : i32
    %c0_i32_0 = arith.constant 0 : i32
    return %arg0, %c0_i32 : i32, i32
  }
  func.func @transform_3(%arg0: i32, %arg1: i32, %arg2: memref<1x1xi32, #tpu.memory_space<smem>>, %arg3: memref<1xi32, #tpu.memory_space<smem>>) -> (i32, i32) {
    %c0_i32 = arith.constant 0 : i32
    %c0_i32_0 = arith.constant 0 : i32
    return %arg0, %c0_i32 : i32, i32
  }
  func.func @transform_4(%arg0: i32, %arg1: i32, %arg2: memref<1x1xi32, #tpu.memory_space<smem>>, %arg3: memref<1xi32, #tpu.memory_space<smem>>) -> (i32, i32) {
    %c0_i32 = arith.constant 0 : i32
    %c0_i32_0 = arith.constant 0 : i32
    %c0_i32_1 = arith.constant 0 : i32
    return %c0_i32, %c0_i32_0 : i32, i32
  }
  func.func @transform_5(%arg0: i32, %arg1: i32, %arg2: memref<1x1xi32, #tpu.memory_space<smem>>, %arg3: memref<1xi32, #tpu.memory_space<smem>>) -> (i32, i32) {
    %c0_i32 = arith.constant 0 : i32
    %c0_i32_0 = arith.constant 0 : i32
    %c0_i32_1 = arith.constant 0 : i32
    return %c0_i32, %c0_i32_0 : i32, i32
  }
  func.func @transform_6(%arg0: i32, %arg1: i32, %arg2: memref<1x1xi32, #tpu.memory_space<smem>>, %arg3: memref<1xi32, #tpu.memory_space<smem>>) -> (i32, i32) {
    %c0_i32 = arith.constant 0 : i32
    %c0_i32_0 = arith.constant 0 : i32
    return %arg0, %c0_i32 : i32, i32
  }
}

</mosaic_0001>

<llo_original>
// kernel: tpu_custom_call.1
$region0: #{tpu_custom_call.1}
  #allocation0 [shape = 'u32[]', space=smem, size = 0x4, offset = 0x4, fixed_abs, tag = 'smem constant byte address 0x4 - core index']
  #allocation1 [shape = 'u32[144,128]{1,0:T(1,128)}', space=vmem, size = 0x12000, scoped, tag = 'internal scratch']
  #allocation2 [shape = 'f32[224,128]{1,0:T(8,128)}', space=vmem, size = 0x1c000, scoped, tag = 'scratch operand']
  #allocation3 [shape = 's32[1]{0}', space=sflag, size = 0x4, scoped, tag = 'scoped memory for tpu_custom_call.1']
  #allocation4 [shape = 's32[1,1]{1,0:T(1,128)S(6)}', space=smem, size = 0x200, scoped, tag = 'prefetched SMEM operand 0']
  #allocation5 [shape = 's32[1]{0:T(128)S(6)}', space=smem, size = 0x200, scoped, tag = 'prefetched SMEM operand 1']
  %s0 = inlined_call_operand.<no memory space> [shape: s32[1,1], index: 0, kind: input, shape index: {}]
  %s1 = inlined_call_operand.<no memory space> [shape: s32[1], index: 1, kind: input, shape index: {}]
  %s2 = inlined_call_operand.hbm [shape: s8[224,256], index: 2, kind: input, shape index: {}]
  %s3 = inlined_call_operand.hbm [shape: bf16[256,128], index: 3, kind: input, shape index: {}]
  %s4 = inlined_call_operand.vmem [shape: f32[224,128], index: 4, kind: input, shape index: {}]
  %s5 = inlined_call_operand.vmem [shape: f32[224,1], index: 5, kind: input, shape index: {}]
  %s6 = inlined_call_operand.hbm [shape: bf16[128,128], index: 6, kind: input, shape index: {}]
  %s7 = inlined_call_operand.vmem [shape: f32[1,128], index: 7, kind: input, shape index: {}]
  %s8 = inlined_call_operand.hbm [shape: f32[224,128], index: 8, kind: output, shape index: {}]
  %s9 = sld [smem:[#allocation0]]
  $region58: #{tpu_custom_call.1} parent=0
    _
  %s11 = ssub.s32 1, %s9
  %s12 = scalar_select 0, %s11, %s9
  %13 = sst [smem:[#allocation4]] %s0
  %14 = sst [smem:[#allocation5]] %s1
  $region1: #{tpu_custom_call.1} parent=0
    #allocation6 [shape = 'u8[57344]{0}', space=vmem, size = 0xe000, scoped, tag = 'input window, operand 2, single buffered']
    #allocation7 [shape = 's32[1]{0}', space=sflag, size = 0x4, scoped, tag = 'scoped memory for tpu_custom_call.1']
    #allocation8 [shape = 's32[1]{0}', space=sflag, size = 0x4, scoped, tag = 'scoped memory for tpu_custom_call.1']
    #allocation9 [shape = 'u8[65536]{0}', space=vmem, size = 0x10000, scoped, tag = 'input window, operand 3, single buffered']
    #allocation10 [shape = 's32[1]{0}', space=sflag, size = 0x4, scoped, tag = 'scoped memory for tpu_custom_call.1']
    #allocation11 [shape = 'u8[32768]{0}', space=vmem, size = 0x8000, scoped, tag = 'input window, operand 6, single buffered']
    #allocation12 [shape = 'u8[114688]{0}', space=vmem, size = 0x1c000, scoped, tag = 'output window, operand 0, single buffered']
    %15 = vsyncpa [#allocation7], 0
    %16 = vsyncpa [#allocation10], 0
    %17 = vsyncpa [#allocation8], 0
    // Predicated region
    $region2: #{tpu_custom_call.1} parent=1 // pred_check
      _
    $region3: #{tpu_custom_call.1} parent=1 // pred_check_branch
      %19 = sbr.rel (0) target = $region5
    $region4: #{tpu_custom_call.1} parent=1 // pred_region
      %s20 = sadd.s32 0, 0
      %s21 = smul.u32 %s20, 128
      %s22 = sadd.s32 %s21, 0
      %s23 = sld [smem:[#allocation4 + %s22]]
      %s24 = smul.u32 2, %s23
      %s26 = ssub.s32 1792, 1792
      %27 = vsyncadd [#allocation7], %s26
      %s28 = smul.addr %s24, 128
      %s29 = scalar_lea.hbm %s2, %s28
      %s30 = sshll.u32 [#allocation6], 4
      %s31 = int_to_ptr.vmem [resolvable:$true] %s30
      %36 = dma.hbm_to_vmem [thread:$0]  %s29, 1792, %s31, [#allocation7], 256, 256, 16
    $region5: #{tpu_custom_call.1} parent=1 // pred_fallthru
      _
    // Predicated region
    $region6: #{tpu_custom_call.1} parent=1 // pred_check
      _
    $region7: #{tpu_custom_call.1} parent=1 // pred_check_branch
      %38 = sbr.rel (0) target = $region9
    $region8: #{tpu_custom_call.1} parent=1 // pred_region
      %s39 = sadd.s32 0, 0
      %s40 = smul.u32 %s39, 128
      %s41 = sadd.s32 %s40, 0
      %s42 = sld [smem:[#allocation4 + %s41]]
      %s43 = smul.u32 32, %s42
      %s45 = ssub.s32 2048, 2048
      %46 = vsyncadd [#allocation10], %s45
      %s47 = smul.addr %s43, 64
      %s48 = scalar_lea.hbm %s3, %s47
      %s49 = sshll.u32 [#allocation9], 4
      %s50 = int_to_ptr.vmem [resolvable:$true] %s49
      %55 = dma.hbm_to_vmem [thread:$0]  %s48, 2048, %s50, [#allocation10], 64, 64, 4
    $region9: #{tpu_custom_call.1} parent=1 // pred_fallthru
      _
    // Predicated region
    $region10: #{tpu_custom_call.1} parent=1 // pred_check
      _
    $region11: #{tpu_custom_call.1} parent=1 // pred_check_branch
      %57 = sbr.rel (0) target = $region13
    $region12: #{tpu_custom_call.1} parent=1 // pred_region
      _
    $region13: #{tpu_custom_call.1} parent=1 // pred_fallthru
      _
    // Predicated region
    $region14: #{tpu_custom_call.1} parent=1 // pred_check
      _
    $region15: #{tpu_custom_call.1} parent=1 // pred_check_branch
      %59 = sbr.rel (0) target = $region17
    $region16: #{tpu_custom_call.1} parent=1 // pred_region
      _
    $region17: #{tpu_custom_call.1} parent=1 // pred_fallthru
      _
    // Predicated region
    $region18: #{tpu_custom_call.1} parent=1 // pred_check
      _
    $region19: #{tpu_custom_call.1} parent=1 // pred_check_branch
      %61 = sbr.rel (0) target = $region21
    $region20: #{tpu_custom_call.1} parent=1 // pred_region
      %s63 = ssub.s32 1024, 1024
      %64 = vsyncadd [#allocation10], %s63
      %s65 = sshll.u32 [#allocation11], 4
      %s66 = int_to_ptr.vmem [resolvable:$true] %s65
      %71 = dma.hbm_to_vmem [thread:$0]  %s6, 1024, %s66, [#allocation10], 64, 64, 4
    $region21: #{tpu_custom_call.1} parent=1 // pred_fallthru
      _
    // Predicated region
    $region22: #{tpu_custom_call.1} parent=1 // pred_check
      _
    $region23: #{tpu_custom_call.1} parent=1 // pred_check_branch
      %73 = sbr.rel (0) target = $region25
    $region24: #{tpu_custom_call.1} parent=1 // pred_region
      _
    $region25: #{tpu_custom_call.1} parent=1 // pred_fallthru
      _
    // Predicated region
    $region26: #{tpu_custom_call.1} parent=1 // pred_check
      _
    $region27: #{tpu_custom_call.1} parent=1 // pred_check_branch
      %75 = sbr.rel (0) target = $region29
    $region28: #{tpu_custom_call.1} parent=1 // pred_region
      %76 = dma.done [#allocation7], 1792
    $region29: #{tpu_custom_call.1} parent=1 // pred_fallthru
      _
    // Predicated region
    $region30: #{tpu_custom_call.1} parent=1 // pred_check
      _
    $region31: #{tpu_custom_call.1} parent=1 // pred_check_branch
      %78 = sbr.rel (0) target = $region33
    $region32: #{tpu_custom_call.1} parent=1 // pred_region
      %79 = dma.done [#allocation10], 2048
    $region33: #{tpu_custom_call.1} parent=1 // pred_fallthru
      _
    // Predicated region
    $region34: #{tpu_custom_call.1} parent=1 // pred_check
      _
    $region35: #{tpu_custom_call.1} parent=1 // pred_check_branch
      %81 = sbr.rel (0) target = $region37
    $region36: #{tpu_custom_call.1} parent=1 // pred_region
      %82 = dma.done [#allocation10], 1024
    $region37: #{tpu_custom_call.1} parent=1 // pred_fallthru
      _
    %s83 = sadd.s32 0, 0
    %s84 = smul.u32 %s83, 128
    %s85 = sadd.s32 %s84, 0
    %s86 = sld [smem:[#allocation4 + %s85]]
    %s87 = smul.u32 2, %s86
    %s88 = sadd.s32 0, 0
    %s89 = smul.u32 %s88, 128
    %s90 = sadd.s32 %s89, 0
    %s91 = sld [smem:[#allocation4 + %s90]]
    %s92 = smul.u32 32, %s91
    %p94 = scmp.eq.s32.totalorder 0, 0
    // Predicated region
    $region38: #{tpu_custom_call.1} parent=1 // pred_check
      %p95 = pneg %p94
    $region39: #{tpu_custom_call.1} parent=1 // pred_check_branch
      %97 = sbr.rel (%p95) target = $region41
    $region40: #{tpu_custom_call.1} parent=1 // pred_region
      %v98 = vld [vmem:[%s4] sm:$0xff]
      %v99 = vld [vmem:[%s4 + $0x8] sm:$0xff]
      %v100 = vld [vmem:[%s4 + $0x10] sm:$0xff]
      %v101 = vld [vmem:[%s4 + $0x18] sm:$0xff]
      %v102 = vld [vmem:[%s4 + $0x20] sm:$0xff]
      %v103 = vld [vmem:[%s4 + $0x28] sm:$0xff]
      %v104 = vld [vmem:[%s4 + $0x30] sm:$0xff]
      %v105 = vld [vmem:[%s4 + $0x38] sm:$0xff]
      %v106 = vld [vmem:[%s4 + $0x40] sm:$0xff]
      %v107 = vld [vmem:[%s4 + $0x48] sm:$0xff]
      %v108 = vld [vmem:[%s4 + $0x50] sm:$0xff]
      %v109 = vld [vmem:[%s4 + $0x58] sm:$0xff]
      %v110 = vld [vmem:[%s4 + $0x60] sm:$0xff]
      %v111 = vld [vmem:[%s4 + $0x68] sm:$0xff]
      %v112 = vld [vmem:[%s4 + $0x70] sm:$0xff]
      %v113 = vld [vmem:[%s4 + $0x78] sm:$0xff]
      %v114 = vld [vmem:[%s4 + $0x80] sm:$0xff]
      %v115 = vld [vmem:[%s4 + $0x88] sm:$0xff]
      %v116 = vld [vmem:[%s4 + $0x90] sm:$0xff]
      %v117 = vld [vmem:[%s4 + $0x98] sm:$0xff]
      %v118 = vld [vmem:[%s4 + $0xa0] sm:$0xff]
      %v119 = vld [vmem:[%s4 + $0xa8] sm:$0xff]
      %v120 = vld [vmem:[%s4 + $0xb0] sm:$0xff]
      %v121 = vld [vmem:[%s4 + $0xb8] sm:$0xff]
      %v122 = vld [vmem:[%s4 + $0xc0] sm:$0xff]
      %v123 = vld [vmem:[%s4 + $0xc8] sm:$0xff]
      %v124 = vld [vmem:[%s4 + $0xd0] sm:$0xff]
      %v125 = vld [vmem:[%s4 + $0xd8] sm:$0xff]
      %126 = vst [vmem:[#allocation2] sm:$0xff] %v98
      %127 = vst [vmem:[#allocation2 + $0x8] sm:$0xff] %v99
      %128 = vst [vmem:[#allocation2 + $0x10] sm:$0xff] %v100
      %129 = vst [vmem:[#allocation2 + $0x18] sm:$0xff] %v101
      %130 = vst [vmem:[#allocation2 + $0x20] sm:$0xff] %v102
      %131 = vst [vmem:[#allocation2 + $0x28] sm:$0xff] %v103
      %132 = vst [vmem:[#allocation2 + $0x30] sm:$0xff] %v104
      %133 = vst [vmem:[#allocation2 + $0x38] sm:$0xff] %v105
      %134 = vst [vmem:[#allocation2 + $0x40] sm:$0xff] %v106
      %135 = vst [vmem:[#allocation2 + $0x48] sm:$0xff] %v107
      %136 = vst [vmem:[#allocation2 + $0x50] sm:$0xff] %v108
      %137 = vst [vmem:[#allocation2 + $0x58] sm:$0xff] %v109
      %138 = vst [vmem:[#allocation2 + $0x60] sm:$0xff] %v110
      %139 = vst [vmem:[#allocation2 + $0x68] sm:$0xff] %v111
      %140 = vst [vmem:[#allocation2 + $0x70] sm:$0xff] %v112
      %141 = vst [vmem:[#allocation2 + $0x78] sm:$0xff] %v113
      %142 = vst [vmem:[#allocation2 + $0x80] sm:$0xff] %v114
      %143 = vst [vmem:[#allocation2 + $0x88] sm:$0xff] %v115
      %144 = vst [vmem:[#allocation2 + $0x90] sm:$0xff] %v116
      %145 = vst [vmem:[#allocation2 + $0x98] sm:$0xff] %v117
      %146 = vst [vmem:[#allocation2 + $0xa0] sm:$0xff] %v118
      %147 = vst [vmem:[#allocation2 + $0xa8] sm:$0xff] %v119
      %148 = vst [vmem:[#allocation2 + $0xb0] sm:$0xff] %v120
      %149 = vst [vmem:[#allocation2 + $0xb8] sm:$0xff] %v121
      %150 = vst [vmem:[#allocation2 + $0xc0] sm:$0xff] %v122
      %151 = vst [vmem:[#allocation2 + $0xc8] sm:$0xff] %v123
      %152 = vst [vmem:[#allocation2 + $0xd0] sm:$0xff] %v124
      %153 = vst [vmem:[#allocation2 + $0xd8] sm:$0xff] %v125
    $region41: #{tpu_custom_call.1} parent=1 // pred_fallthru
      _
    %s154 = sld [smem:[#allocation5]]
    %p155 = scmp.lt.s32.totalorder 0, %s154
    // Predicated region
    $region42: #{tpu_custom_call.1} parent=1 // pred_check
      %p156 = pneg %p155
    $region43: #{tpu_custom_call.1} parent=1 // pred_check_branch
      %158 = sbr.rel (%p156) target = $region45
    $region44: #{tpu_custom_call.1} parent=1 // pred_region
      %v159 = vld [vmem:[#allocation6] sm:$0xff]
      %v160 = vld [vmem:[#allocation6 + $0x8] sm:$0xff]
      %v161 = vld [vmem:[#allocation6 + $0x10] sm:$0xff]
      %v162 = vld [vmem:[#allocation6 + $0x18] sm:$0xff]
      %v163 = vld [vmem:[#allocation6 + $0x20] sm:$0xff]
      %v164 = vld [vmem:[#allocation6 + $0x28] sm:$0xff]
      %v165 = vld [vmem:[#allocation6 + $0x30] sm:$0xff]
      %v166 = vld [vmem:[#allocation6 + $0x38] sm:$0xff]
      %v167 = vld [vmem:[#allocation6 + $0x40] sm:$0xff]
      %v168 = vld [vmem:[#allocation6 + $0x48] sm:$0xff]
      %v169 = vld [vmem:[#allocation6 + $0x50] sm:$0xff]
      %v170 = vld [vmem:[#allocation6 + $0x58] sm:$0xff]
      %v171 = vld [vmem:[#allocation6 + $0x60] sm:$0xff]
      %v172 = vld [vmem:[#allocation6 + $0x68] sm:$0xff]
      %v173 = vunpack.c.l.s8.bf16 %v159
      %v174 = vunpack.c.l.s8.bf16 %v160
      %v175 = vunpack.c.h.s8.bf16 %v159
      %v176 = vunpack.c.h.s8.bf16 %v160
      %v177 = vunpack.c.l.s8.bf16 %v161
      %v178 = vunpack.c.l.s8.bf16 %v162
      %v179 = vunpack.c.h.s8.bf16 %v161
      %v180 = vunpack.c.h.s8.bf16 %v162
      %v181 = vunpack.c.l.s8.bf16 %v163
      %v182 = vunpack.c.l.s8.bf16 %v164
      %v183 = vunpack.c.h.s8.bf16 %v163
      %v184 = vunpack.c.h.s8.bf16 %v164
      %v185 = vunpack.c.l.s8.bf16 %v165
      %v186 = vunpack.c.l.s8.bf16 %v166
      %v187 = vunpack.c.h.s8.bf16 %v165
      %v188 = vunpack.c.h.s8.bf16 %v166
      %v189 = vunpack.c.l.s8.bf16 %v167
      %v190 = vunpack.c.l.s8.bf16 %v168
      %v191 = vunpack.c.h.s8.bf16 %v167
      %v192 = vunpack.c.h.s8.bf16 %v168
      %v193 = vunpack.c.l.s8.bf16 %v169
      %v194 = vunpack.c.l.s8.bf16 %v170
      %v195 = vunpack.c.h.s8.bf16 %v169
      %v196 = vunpack.c.h.s8.bf16 %v170
      %v197 = vunpack.c.l.s8.bf16 %v171
      %v198 = vunpack.c.l.s8.bf16 %v172
      %v199 = vunpack.c.h.s8.bf16 %v171
      %v200 = vunpack.c.h.s8.bf16 %v172
      %v201 = vld [vmem:[#allocation2] sm:$0xff]
      %v202 = vld [vmem:[#allocation2 + $0x8] sm:$0xff]
      %v203 = vld [vmem:[#allocation2 + $0x10] sm:$0xff]
      %v204 = vld [vmem:[#allocation2 + $0x18] sm:$0xff]
      %v205 = vld [vmem:[#allocation2 + $0x20] sm:$0xff]
      %v206 = vld [vmem:[#allocation2 + $0x28] sm:$0xff]
      %v207 = vld [vmem:[#allocation2 + $0x30] sm:$0xff]
      %v208 = vld [vmem:[#allocation2 + $0x38] sm:$0xff]
      %v209 = vld [vmem:[#allocation2 + $0x40] sm:$0xff]
      %v210 = vld [vmem:[#allocation2 + $0x48] sm:$0xff]
      %v211 = vld [vmem:[#allocation2 + $0x50] sm:$0xff]
      %v212 = vld [vmem:[#allocation2 + $0x58] sm:$0xff]
      %v213 = vld [vmem:[#allocation2 + $0x60] sm:$0xff]
      %v214 = vld [vmem:[#allocation2 + $0x68] sm:$0xff]
      %v215 = vld [vmem:[#allocation2 + $0x70] sm:$0xff]
      %v216 = vld [vmem:[#allocation2 + $0x78] sm:$0xff]
      %v217 = vld [vmem:[#allocation2 + $0x80] sm:$0xff]
      %v218 = vld [vmem:[#allocation2 + $0x88] sm:$0xff]
      %v219 = vld [vmem:[#allocation2 + $0x90] sm:$0xff]
      %v220 = vld [vmem:[#allocation2 + $0x98] sm:$0xff]
      %v221 = vld [vmem:[#allocation2 + $0xa0] sm:$0xff]
      %v222 = vld [vmem:[#allocation2 + $0xa8] sm:$0xff]
      %v223 = vld [vmem:[#allocation2 + $0xb0] sm:$0xff]
      %v224 = vld [vmem:[#allocation2 + $0xb8] sm:$0xff]
      %v225 = vld [vmem:[#allocation2 + $0xc0] sm:$0xff]
      %v226 = vld [vmem:[#allocation2 + $0xc8] sm:$0xff]
      %v227 = vld [vmem:[#allocation2 + $0xd0] sm:$0xff]
      %v228 = vld [vmem:[#allocation2 + $0xd8] sm:$0xff]
      %v229 = vld [vmem:[#allocation9] sm:$0xf]
      %v230 = vld [vmem:[#allocation9 + $0x4] sm:$0xf]
      %v231 = vld [vmem:[#allocation9 + $0x8] sm:$0xf]
      %v232 = vld [vmem:[#allocation9 + $0xc] sm:$0xf]
      %v233 = vld [vmem:[#allocation9 + $0x10] sm:$0xf]
      %v234 = vld [vmem:[#allocation9 + $0x14] sm:$0xf]
      %v235 = vld [vmem:[#allocation9 + $0x18] sm:$0xf]
      %v236 = vld [vmem:[#allocation9 + $0x1c] sm:$0xf]
      %v237 = vld [vmem:[#allocation9 + $0x20] sm:$0xf]
      %v238 = vld [vmem:[#allocation9 + $0x24] sm:$0xf]
      %v239 = vld [vmem:[#allocation9 + $0x28] sm:$0xf]
      %v240 = vld [vmem:[#allocation9 + $0x2c] sm:$0xf]
      %v241 = vld [vmem:[#allocation9 + $0x30] sm:$0xf]
      %v242 = vld [vmem:[#allocation9 + $0x34] sm:$0xf]
      %v243 = vld [vmem:[#allocation9 + $0x38] sm:$0xf]
      %v244 = vld [vmem:[#allocation9 + $0x3c] sm:$0xf]
      %v245 = vld [vmem:[#allocation9 + $0x40] sm:$0xf]
      %v246 = vld [vmem:[#allocation9 + $0x44] sm:$0xf]
      %v247 = vld [vmem:[#allocation9 + $0x48] sm:$0xf]
      %v248 = vld [vmem:[#allocation9 + $0x4c] sm:$0xf]
      %v249 = vld [vmem:[#allocation9 + $0x50] sm:$0xf]
      %v250 = vld [vmem:[#allocation9 + $0x54] sm:$0xf]
      %v251 = vld [vmem:[#allocation9 + $0x58] sm:$0xf]
      %v252 = vld [vmem:[#allocation9 + $0x5c] sm:$0xf]
      %v253 = vld [vmem:[#allocation9 + $0x60] sm:$0xf]
      %v254 = vld [vmem:[#allocation9 + $0x64] sm:$0xf]
      %v255 = vld [vmem:[#allocation9 + $0x68] sm:$0xf]
      %v256 = vld [vmem:[#allocation9 + $0x6c] sm:$0xf]
      %v257 = vld [vmem:[#allocation9 + $0x70] sm:$0xf]
      %v258 = vld [vmem:[#allocation9 + $0x74] sm:$0xf]
      %v259 = vld [vmem:[#allocation9 + $0x78] sm:$0xf]
      %v260 = vld [vmem:[#allocation9 + $0x7c] sm:$0xf]
      %v293 = vunpack.c.l.b16 %v229
      %v294 = vunpack.c.l.b16 %v230
      %v295 = vunpack.c.l.b16 %v231
      %v296 = vunpack.c.l.b16 %v232
      %v297 = vunpack.c.l.b16 %v233
      %v298 = vunpack.c.l.b16 %v234
      %v299 = vunpack.c.l.b16 %v235
      %v300 = vunpack.c.l.b16 %v236
      %v301 = vunpack.c.l.b16 %v237
      %v302 = vunpack.c.l.b16 %v238
      %v303 = vunpack.c.l.b16 %v239
      %v304 = vunpack.c.l.b16 %v240
      %v305 = vunpack.c.l.b16 %v241
      %v306 = vunpack.c.l.b16 %v242
      %v307 = vunpack.c.l.b16 %v243
      %v308 = vunpack.c.l.b16 %v244
      %v309 = vunpack.c.l.b16 %v245
      %v310 = vunpack.c.l.b16 %v246
      %v311 = vunpack.c.l.b16 %v247
      %v312 = vunpack.c.l.b16 %v248
      %v313 = vunpack.c.l.b16 %v249
      %v314 = vunpack.c.l.b16 %v250
      %v315 = vunpack.c.l.b16 %v251
      %v316 = vunpack.c.l.b16 %v252
      %v317 = vunpack.c.l.b16 %v253
      %v318 = vunpack.c.l.b16 %v254
      %v319 = vunpack.c.l.b16 %v255
      %v320 = vunpack.c.l.b16 %v256
      %v321 = vunpack.c.l.b16 %v257
      %v322 = vunpack.c.l.b16 %v258
      %v323 = vunpack.c.l.b16 %v259
      %v324 = vunpack.c.l.b16 %v260
      %v325 = vpack.c.b16 %v294, %v293
      %v326 = vpack.c.b16 %v296, %v295
      %v327 = vpack.c.b16 %v298, %v297
      %v328 = vpack.c.b16 %v300, %v299
      %v329 = vpack.c.b16 %v302, %v301
      %v330 = vpack.c.b16 %v304, %v303
      %v331 = vpack.c.b16 %v306, %v305
      %v332 = vpack.c.b16 %v308, %v307
      %v333 = vpack.c.b16 %v310, %v309
      %v334 = vpack.c.b16 %v312, %v311
      %v335 = vpack.c.b16 %v314, %v313
      %v336 = vpack.c.b16 %v316, %v315
      %v337 = vpack.c.b16 %v318, %v317
      %v338 = vpack.c.b16 %v320, %v319
      %v339 = vpack.c.b16 %v322, %v321
      %v340 = vpack.c.b16 %v324, %v323
      %357 = vmatprep.subr.bf16.mxu0 0
      %358 = vmatpush1.bf16.msra.mxu0 %v325
      %359 = vmatprep.subr.bf16.mxu0 0
      %360 = vmatpush1.bf16.msra.mxu0 %v326
      %361 = vmatprep.subr.bf16.mxu0 0
      %362 = vmatpush1.bf16.msra.mxu0 %v327
      %363 = vmatprep.subr.bf16.mxu0 0
      %364 = vmatpush1.bf16.msra.mxu0 %v328
      %365 = vmatprep.subr.bf16.mxu0 0
      %366 = vmatpush1.bf16.msra.mxu0 %v329
      %367 = vmatprep.subr.bf16.mxu0 0
      %368 = vmatpush1.bf16.msra.mxu0 %v330
      %369 = vmatprep.subr.bf16.mxu0 0
      %370 = vmatpush1.bf16.msra.mxu0 %v331
      %371 = vmatprep.subr.bf16.mxu0 0
      %372 = vmatpush1.bf16.msra.mxu0 %v332
      %373 = vmatprep.subr.bf16.mxu0 0
      %374 = vmatpush1.bf16.msra.mxu0 %v333
      %375 = vmatprep.subr.bf16.mxu0 0
      %376 = vmatpush1.bf16.msra.mxu0 %v334
      %377 = vmatprep.subr.bf16.mxu0 0
      %378 = vmatpush1.bf16.msra.mxu0 %v335
      %379 = vmatprep.subr.bf16.mxu0 0
      %380 = vmatpush1.bf16.msra.mxu0 %v336
      %381 = vmatprep.subr.bf16.mxu0 0
      %382 = vmatpush1.bf16.msra.mxu0 %v337
      %383 = vmatprep.subr.bf16.mxu0 0
      %384 = vmatpush1.bf16.msra.mxu0 %v338
      %385 = vmatprep.subr.bf16.mxu0 0
      %386 = vmatpush1.bf16.msra.mxu0 %v339
      %387 = vmatprep.subr.bf16.mxu0 0
      %388 = vmatpush1.bf16.msra.mxu0 %v340
      %389 = vmatprep.mubr.bf16.mxu0 %v174
      %390 = vmatmul.mubr.bf16.gmra.mrb[0].mxu0 %v173
      %v391 = vpop.f32.mrb[0].mxu0
      %v392 = vadd.f32 0.0, %v391
      %v393 = vpop.f32.mrb[0].mxu0
      %v394 = vpop.f32.mrb[0].mxu0
      %v395 = vadd.f32 0.0, %v394
      %v396 = vpop.f32.mrb[0].mxu0
      %397 = vmatprep.mubr.bf16.mxu0 %v176
      %398 = vmatmul.mubr.bf16.gmra.mrb[0].mxu0 %v175
      %v399 = vpop.f32.mrb[0].mxu0
      %v400 = vadd.f32 0.0, %v399
      %v401 = vpop.f32.mrb[0].mxu0
      %v402 = vpop.f32.mrb[0].mxu0
      %v403 = vadd.f32 0.0, %v402
      %v404 = vpop.f32.mrb[0].mxu0
      %405 = vmatprep.mubr.bf16.mxu0 %v178
      %406 = vmatmul.mubr.bf16.gmra.mrb[0].mxu0 %v177
      %v407 = vpop.f32.mrb[0].mxu0
      %v408 = vadd.f32 0.0, %v407
      %v409 = vpop.f32.mrb[0].mxu0
      %v410 = vpop.f32.mrb[0].mxu0
      %v411 = vadd.f32 0.0, %v410
      %v412 = vpop.f32.mrb[0].mxu0
      %413 = vmatprep.mubr.bf16.mxu0 %v180
      %414 = vmatmul.mubr.bf16.gmra.mrb[0].mxu0 %v179
      %v415 = vpop.f32.mrb[0].mxu0
      %v416 = vadd.f32 0.0, %v415
      %v417 = vpop.f32.mrb[0].mxu0
      %v418 = vpop.f32.mrb[0].mxu0
      %v419 = vadd.f32 0.0, %v418
      %v420 = vpop.f32.mrb[0].mxu0
      %421 = vmatprep.mubr.bf16.mxu0 %v182
      %422 = vmatmul.mubr.bf16.gmra.mrb[0].mxu0 %v181
      %v423 = vpop.f32.mrb[0].mxu0
      %v424 = vadd.f32 0.0, %v423
      %v425 = vpop.f32.mrb[0].mxu0
      %v426 = vpop.f32.mrb[0].mxu0
      %v427 = vadd.f32 0.0, %v426
      %v428 = vpop.f32.mrb[0].mxu0
      %429 = vmatprep.mubr.bf16.mxu0 %v184
      %430 = vmatmul.mubr.bf16.gmra.mrb[0].mxu0 %v183
      %v431 = vpop.f32.mrb[0].mxu0
      %v432 = vadd.f32 0.0, %v431
      %v433 = vpop.f32.mrb[0].mxu0
      %v434 = vpop.f32.mrb[0].mxu0
      %v435 = vadd.f32 0.0, %v434
      %v436 = vpop.f32.mrb[0].mxu0
      %437 = vmatprep.mubr.bf16.mxu0 %v186
      %438 = vmatmul.mubr.bf16.gmra.mrb[0].mxu0 %v185
      %v439 = vpop.f32.mrb[0].mxu0
      %v440 = vadd.f32 0.0, %v439
      %v441 = vpop.f32.mrb[0].mxu0
      %v442 = vpop.f32.mrb[0].mxu0
      %v443 = vadd.f32 0.0, %v442
      %v444 = vpop.f32.mrb[0].mxu0
      %445 = vmatprep.mubr.bf16.mxu0 %v188
      %446 = vmatmul.mubr.bf16.gmra.mrb[0].mxu0 %v187
      %v447 = vpop.f32.mrb[0].mxu0
      %v448 = vadd.f32 0.0, %v447
      %v449 = vpop.f32.mrb[0].mxu0
      %v450 = vpop.f32.mrb[0].mxu0
      %v451 = vadd.f32 0.0, %v450
      %v452 = vpop.f32.mrb[0].mxu0
      %453 = vmatprep.mubr.bf16.mxu0 %v190
      %454 = vmatmul.mubr.bf16.gmra.mrb[0].mxu0 %v189
      %v455 = vpop.f32.mrb[0].mxu0
      %v456 = vadd.f32 0.0, %v455
      %v457 = vpop.f32.mrb[0].mxu0
      %v458 = vpop.f32.mrb[0].mxu0
      %v459 = vadd.f32 0.0, %v458
      %v460 = vpop.f32.mrb[0].mxu0
      %461 = vmatprep.mubr.bf16.mxu0 %v192
      %462 = vmatmul.mubr.bf16.gmra.mrb[0].mxu0 %v191
      %v463 = vpop.f32.mrb[0].mxu0
      %v464 = vadd.f32 0.0, %v463
      %v465 = vpop.f32.mrb[0].mxu0
      %v466 = vpop.f32.mrb[0].mxu0
      %v467 = vadd.f32 0.0, %v466
      %v468 = vpop.f32.mrb[0].mxu0
      %469 = vmatprep.mubr.bf16.mxu0 %v194
      %470 = vmatmul.mubr.bf16.gmra.mrb[0].mxu0 %v193
      %v471 = vpop.f32.mrb[0].mxu0
      %v472 = vadd.f32 0.0, %v471
      %v473 = vpop.f32.mrb[0].mxu0
      %v474 = vpop.f32.mrb[0].mxu0
      %v475 = vadd.f32 0.0, %v474
      %v476 = vpop.f32.mrb[0].mxu0
      %477 = vmatprep.mubr.bf16.mxu0 %v196
      %478 = vmatmul.mubr.bf16.gmra.mrb[0].mxu0 %v195
      %v479 = vpop.f32.mrb[0].mxu0
      %v480 = vadd.f32 0.0, %v479
      %v481 = vpop.f32.mrb[0].mxu0
      %v482 = vpop.f32.mrb[0].mxu0
      %v483 = vadd.f32 0.0, %v482
      %v484 = vpop.f32.mrb[0].mxu0
      %485 = vmatprep.mubr.bf16.mxu0 %v198
      %486 = vmatmul.mubr.bf16.gmra.mrb[0].mxu0 %v197
      %v487 = vpop.f32.mrb[0].mxu0
      %v488 = vadd.f32 0.0, %v487
      %v489 = vpop.f32.mrb[0].mxu0
      %v490 = vpop.f32.mrb[0].mxu0
      %v491 = vadd.f32 0.0, %v490
      %v492 = vpop.f32.mrb[0].mxu0
      %493 = vmatprep.mubr.bf16.mxu0 %v200
      %494 = vmatmul.mubr.bf16.gmra.mrb[0].mxu0 %v199
      %v495 = vpop.f32.mrb[0].mxu0
      %v496 = vadd.f32 0.0, %v495
      %v497 = vpop.f32.mrb[0].mxu0
      %v498 = vpop.f32.mrb[0].mxu0
      %v499 = vadd.f32 0.0, %v498
      %v500 = vpop.f32.mrb[0].mxu0
      %501 = vdwg.mxu0
      %v502 = vadd.f32 %v201, %v392
      %v503 = vadd.f32 %v202, %v395
      %v504 = vadd.f32 %v203, %v400
      %v505 = vadd.f32 %v204, %v403
      %v506 = vadd.f32 %v205, %v408
      %v507 = vadd.f32 %v206, %v411
      %v508 = vadd.f32 %v207, %v416
      %v509 = vadd.f32 %v208, %v419
      %v510 = vadd.f32 %v209, %v424
      %v511 = vadd.f32 %v210, %v427
      %v512 = vadd.f32 %v211, %v432
      %v513 = vadd.f32 %v212, %v435
      %v514 = vadd.f32 %v213, %v440
      %v515 = vadd.f32 %v214, %v443
      %v516 = vadd.f32 %v215, %v448
      %v517 = vadd.f32 %v216, %v451
      %v518 = vadd.f32 %v217, %v456
      %v519 = vadd.f32 %v218, %v459
      %v520 = vadd.f32 %v219, %v464
      %v521 = vadd.f32 %v220, %v467
      %v522 = vadd.f32 %v221, %v472
      %v523 = vadd.f32 %v222, %v475
      %v524 = vadd.f32 %v223, %v480
      %v525 = vadd.f32 %v224, %v483
      %v526 = vadd.f32 %v225, %v488
      %v527 = vadd.f32 %v226, %v491
      %v528 = vadd.f32 %v227, %v496
      %v529 = vadd.f32 %v228, %v499
      %530 = vst [vmem:[#allocation2] sm:$0xff] %v502
      %531 = vst [vmem:[#allocation2 + $0x8] sm:$0xff] %v503
      %532 = vst [vmem:[#allocation2 + $0x10] sm:$0xff] %v504
      %533 = vst [vmem:[#allocation2 + $0x18] sm:$0xff] %v505
      %534 = vst [vmem:[#allocation2 + $0x20] sm:$0xff] %v506
      %535 = vst [vmem:[#allocation2 + $0x28] sm:$0xff] %v507
      %536 = vst [vmem:[#allocation2 + $0x30] sm:$0xff] %v508
      %537 = vst [vmem:[#allocation2 + $0x38] sm:$0xff] %v509
      %538 = vst [vmem:[#allocation2 + $0x40] sm:$0xff] %v510
      %539 = vst [vmem:[#allocation2 + $0x48] sm:$0xff] %v511
      %540 = vst [vmem:[#allocation2 + $0x50] sm:$0xff] %v512
      %541 = vst [vmem:[#allocation2 + $0x58] sm:$0xff] %v513
      %542 = vst [vmem:[#allocation2 + $0x60] sm:$0xff] %v514
      %543 = vst [vmem:[#allocation2 + $0x68] sm:$0xff] %v515
      %544 = vst [vmem:[#allocation2 + $0x70] sm:$0xff] %v516
      %545 = vst [vmem:[#allocation2 + $0x78] sm:$0xff] %v517
      %546 = vst [vmem:[#allocation2 + $0x80] sm:$0xff] %v518
      %547 = vst [vmem:[#allocation2 + $0x88] sm:$0xff] %v519
      %548 = vst [vmem:[#allocation2 + $0x90] sm:$0xff] %v520
      %549 = vst [vmem:[#allocation2 + $0x98] sm:$0xff] %v521
      %550 = vst [vmem:[#allocation2 + $0xa0] sm:$0xff] %v522
      %551 = vst [vmem:[#allocation2 + $0xa8] sm:$0xff] %v523
      %552 = vst [vmem:[#allocation2 + $0xb0] sm:$0xff] %v524
      %553 = vst [vmem:[#allocation2 + $0xb8] sm:$0xff] %v525
      %554 = vst [vmem:[#allocation2 + $0xc0] sm:$0xff] %v526
      %555 = vst [vmem:[#allocation2 + $0xc8] sm:$0xff] %v527
      %556 = vst [vmem:[#allocation2 + $0xd0] sm:$0xff] %v528
      %557 = vst [vmem:[#allocation2 + $0xd8] sm:$0xff] %v529
    $region45: #{tpu_custom_call.1} parent=1 // pred_fallthru
      _
    // Predicated region
    $region46: #{tpu_custom_call.1} parent=1 // pred_check
      %p558 = pneg %p94
    $region47: #{tpu_custom_call.1} parent=1 // pred_check_branch
      %560 = sbr.rel (%p558) target = $region49
    $region48: #{tpu_custom_call.1} parent=1 // pred_region
      %v561 = vld [vmem:[#allocation2] sm:$0xff]
      %v562 = vld [vmem:[#allocation2 + $0x8] sm:$0xff]
      %v563 = vld [vmem:[#allocation2 + $0x10] sm:$0xff]
      %v564 = vld [vmem:[#allocation2 + $0x18] sm:$0xff]
      %v565 = vld [vmem:[#allocation2 + $0x20] sm:$0xff]
      %v566 = vld [vmem:[#allocation2 + $0x28] sm:$0xff]
      %v567 = vld [vmem:[#allocation2 + $0x30] sm:$0xff]
      %v568 = vld [vmem:[#allocation2 + $0x38] sm:$0xff]
      %v569 = vld [vmem:[#allocation2 + $0x40] sm:$0xff]
      %v570 = vld [vmem:[#allocation2 + $0x48] sm:$0xff]
      %v571 = vld [vmem:[#allocation2 + $0x50] sm:$0xff]
      %v572 = vld [vmem:[#allocation2 + $0x58] sm:$0xff]
      %v573 = vld [vmem:[#allocation2 + $0x60] sm:$0xff]
      %v574 = vld [vmem:[#allocation2 + $0x68] sm:$0xff]
      %v575 = vld [vmem:[#allocation2 + $0x70] sm:$0xff]
      %v576 = vld [vmem:[#allocation2 + $0x78] sm:$0xff]
      %v577 = vld [vmem:[#allocation2 + $0x80] sm:$0xff]
      %v578 = vld [vmem:[#allocation2 + $0x88] sm:$0xff]
      %v579 = vld [vmem:[#allocation2 + $0x90] sm:$0xff]
      %v580 = vld [vmem:[#allocation2 + $0x98] sm:$0xff]
      %v581 = vld [vmem:[#allocation2 + $0xa0] sm:$0xff]
      %v582 = vld [vmem:[#allocation2 + $0xa8] sm:$0xff]
      %v583 = vld [vmem:[#allocation2 + $0xb0] sm:$0xff]
      %v584 = vld [vmem:[#allocation2 + $0xb8] sm:$0xff]
      %v585 = vld [vmem:[#allocation2 + $0xc0] sm:$0xff]
      %v586 = vld [vmem:[#allocation2 + $0xc8] sm:$0xff]
      %v587 = vld [vmem:[#allocation2 + $0xd0] sm:$0xff]
      %v588 = vld [vmem:[#allocation2 + $0xd8] sm:$0xff]
      %v589 = vld [vmem:[%s5] sm:$0xff]
      %v590 = vld [vmem:[%s5 + $0x8] sm:$0xff]
      %v591 = vld [vmem:[%s5 + $0x10] sm:$0xff]
      %v592 = vld [vmem:[%s5 + $0x18] sm:$0xff]
      %v593 = vld [vmem:[%s5 + $0x20] sm:$0xff]
      %v594 = vld [vmem:[%s5 + $0x28] sm:$0xff]
      %v595 = vld [vmem:[%s5 + $0x30] sm:$0xff]
      %v596 = vld [vmem:[%s5 + $0x38] sm:$0xff]
      %v597 = vld [vmem:[%s5 + $0x40] sm:$0xff]
      %v598 = vld [vmem:[%s5 + $0x48] sm:$0xff]
      %v599 = vld [vmem:[%s5 + $0x50] sm:$0xff]
      %v600 = vld [vmem:[%s5 + $0x58] sm:$0xff]
      %v601 = vld [vmem:[%s5 + $0x60] sm:$0xff]
      %v602 = vld [vmem:[%s5 + $0x68] sm:$0xff]
      %v603 = vld [vmem:[%s5 + $0x70] sm:$0xff]
      %v604 = vld [vmem:[%s5 + $0x78] sm:$0xff]
      %v605 = vld [vmem:[%s5 + $0x80] sm:$0xff]
      %v606 = vld [vmem:[%s5 + $0x88] sm:$0xff]
      %v607 = vld [vmem:[%s5 + $0x90] sm:$0xff]
      %v608 = vld [vmem:[%s5 + $0x98] sm:$0xff]
      %v609 = vld [vmem:[%s5 + $0xa0] sm:$0xff]
      %v610 = vld [vmem:[%s5 + $0xa8] sm:$0xff]
      %v611 = vld [vmem:[%s5 + $0xb0] sm:$0xff]
      %v612 = vld [vmem:[%s5 + $0xb8] sm:$0xff]
      %v613 = vld [vmem:[%s5 + $0xc0] sm:$0xff]
      %v614 = vld [vmem:[%s5 + $0xc8] sm:$0xff]
      %v615 = vld [vmem:[%s5 + $0xd0] sm:$0xff]
      %v616 = vld [vmem:[%s5 + $0xd8] sm:$0xff]
      %618 = vset.pattern.permute.xlu0 0
      %619 = vperm.xlu0 %618, %v589
      %v620 = vpop.permute.xlu0 %619
      %623 = vset.pattern.permute.xlu0 0
      %624 = vperm.xlu0 %623, %v590
      %v625 = vpop.permute.xlu0 %624
      %628 = vset.pattern.permute.xlu0 0
      %629 = vperm.xlu0 %628, %v591
      %v630 = vpop.permute.xlu0 %629
      %633 = vset.pattern.permute.xlu0 0
      %634 = vperm.xlu0 %633, %v592
      %v635 = vpop.permute.xlu0 %634
      %638 = vset.pattern.permute.xlu0 0
      %639 = vperm.xlu0 %638, %v593
      %v640 = vpop.permute.xlu0 %639
      %643 = vset.pattern.permute.xlu0 0
      %644 = vperm.xlu0 %643, %v594
      %v645 = vpop.permute.xlu0 %644
      %648 = vset.pattern.permute.xlu0 0
      %649 = vperm.xlu0 %648, %v595
      %v650 = vpop.permute.xlu0 %649
      %653 = vset.pattern.permute.xlu0 0
      %654 = vperm.xlu0 %653, %v596
      %v655 = vpop.permute.xlu0 %654
      %658 = vset.pattern.permute.xlu0 0
      %659 = vperm.xlu0 %658, %v597
      %v660 = vpop.permute.xlu0 %659
      %663 = vset.pattern.permute.xlu0 0
      %664 = vperm.xlu0 %663, %v598
      %v665 = vpop.permute.xlu0 %664
      %668 = vset.pattern.permute.xlu0 0
      %669 = vperm.xlu0 %668, %v599
      %v670 = vpop.permute.xlu0 %669
      %673 = vset.pattern.permute.xlu0 0
      %674 = vperm.xlu0 %673, %v600
      %v675 = vpop.permute.xlu0 %674
      %678 = vset.pattern.permute.xlu0 0
      %679 = vperm.xlu0 %678, %v601
      %v680 = vpop.permute.xlu0 %679
      %683 = vset.pattern.permute.xlu0 0
      %684 = vperm.xlu0 %683, %v602
      %v685 = vpop.permute.xlu0 %684
      %688 = vset.pattern.permute.xlu0 0
      %689 = vperm.xlu0 %688, %v603
      %v690 = vpop.permute.xlu0 %689
      %693 = vset.pattern.permute.xlu0 0
      %694 = vperm.xlu0 %693, %v604
      %v695 = vpop.permute.xlu0 %694
      %698 = vset.pattern.permute.xlu0 0
      %699 = vperm.xlu0 %698, %v605
      %v700 = vpop.permute.xlu0 %699
      %703 = vset.pattern.permute.xlu0 0
      %704 = vperm.xlu0 %703, %v606
      %v705 = vpop.permute.xlu0 %704
      %708 = vset.pattern.permute.xlu0 0
      %709 = vperm.xlu0 %708, %v607
      %v710 = vpop.permute.xlu0 %709
      %713 = vset.pattern.permute.xlu0 0
      %714 = vperm.xlu0 %713, %v608
      %v715 = vpop.permute.xlu0 %714
      %718 = vset.pattern.permute.xlu0 0
      %719 = vperm.xlu0 %718, %v609
      %v720 = vpop.permute.xlu0 %719
      %723 = vset.pattern.permute.xlu0 0
      %724 = vperm.xlu0 %723, %v610
      %v725 = vpop.permute.xlu0 %724
      %728 = vset.pattern.permute.xlu0 0
      %729 = vperm.xlu0 %728, %v611
      %v730 = vpop.permute.xlu0 %729
      %733 = vset.pattern.permute.xlu0 0
      %734 = vperm.xlu0 %733, %v612
      %v735 = vpop.permute.xlu0 %734
      %738 = vset.pattern.permute.xlu0 0
      %739 = vperm.xlu0 %738, %v613
      %v740 = vpop.permute.xlu0 %739
      %743 = vset.pattern.permute.xlu0 0
      %744 = vperm.xlu0 %743, %v614
      %v745 = vpop.permute.xlu0 %744
      %748 = vset.pattern.permute.xlu0 0
      %749 = vperm.xlu0 %748, %v615
      %v750 = vpop.permute.xlu0 %749
      %753 = vset.pattern.permute.xlu0 0
      %754 = vperm.xlu0 %753, %v616
      %v755 = vpop.permute.xlu0 %754
      %v757 = vmul.f32 %v561, %v620
      %v758 = vmul.f32 %v562, %v625
      %v759 = vmul.f32 %v563, %v630
      %v760 = vmul.f32 %v564, %v635
      %v761 = vmul.f32 %v565, %v640
      %v762 = vmul.f32 %v566, %v645
      %v763 = vmul.f32 %v567, %v650
      %v764 = vmul.f32 %v568, %v655
      %v765 = vmul.f32 %v569, %v660
      %v766 = vmul.f32 %v570, %v665
      %v767 = vmul.f32 %v571, %v670
      %v768 = vmul.f32 %v572, %v675
      %v769 = vmul.f32 %v573, %v680
      %v770 = vmul.f32 %v574, %v685
      %v771 = vmul.f32 %v575, %v690
      %v772 = vmul.f32 %v576, %v695
      %v773 = vmul.f32 %v577, %v700
      %v774 = vmul.f32 %v578, %v705
      %v775 = vmul.f32 %v579, %v710
      %v776 = vmul.f32 %v580, %v715
      %v777 = vmul.f32 %v581, %v720
      %v778 = vmul.f32 %v582, %v725
      %v779 = vmul.f32 %v583, %v730
      %v780 = vmul.f32 %v584, %v735
      %v781 = vmul.f32 %v585, %v740
      %v782 = vmul.f32 %v586, %v745
      %v783 = vmul.f32 %v587, %v750
      %v784 = vmul.f32 %v588, %v755
      %v785 = vpack.c.bf16 %v758, %v757
      %v786 = vpack.c.bf16 %v760, %v759
      %v787 = vpack.c.bf16 %v762, %v761
      %v788 = vpack.c.bf16 %v764, %v763
      %v789 = vpack.c.bf16 %v766, %v765
      %v790 = vpack.c.bf16 %v768, %v767
      %v791 = vpack.c.bf16 %v770, %v769
      %v792 = vpack.c.bf16 %v772, %v771
      %v793 = vpack.c.bf16 %v774, %v773
      %v794 = vpack.c.bf16 %v776, %v775
      %v795 = vpack.c.bf16 %v778, %v777
      %v796 = vpack.c.bf16 %v780, %v779
      %v797 = vpack.c.bf16 %v782, %v781
      %v798 = vpack.c.bf16 %v784, %v783
      %v799 = vld [vmem:[#allocation11] sm:$0xf]
      %v800 = vld [vmem:[#allocation11 + $0x4] sm:$0xf]
      %v801 = vld [vmem:[#allocation11 + $0x8] sm:$0xf]
      %v802 = vld [vmem:[#allocation11 + $0xc] sm:$0xf]
      %v803 = vld [vmem:[#allocation11 + $0x10] sm:$0xf]
      %v804 = vld [vmem:[#allocation11 + $0x14] sm:$0xf]
      %v805 = vld [vmem:[#allocation11 + $0x18] sm:$0xf]
      %v806 = vld [vmem:[#allocation11 + $0x1c] sm:$0xf]
      %v807 = vld [vmem:[#allocation11 + $0x20] sm:$0xf]
      %v808 = vld [vmem:[#allocation11 + $0x24] sm:$0xf]
      %v809 = vld [vmem:[#allocation11 + $0x28] sm:$0xf]
      %v810 = vld [vmem:[#allocation11 + $0x2c] sm:$0xf]
      %v811 = vld [vmem:[#allocation11 + $0x30] sm:$0xf]
      %v812 = vld [vmem:[#allocation11 + $0x34] sm:$0xf]
      %v813 = vld [vmem:[#allocation11 + $0x38] sm:$0xf]
      %v814 = vld [vmem:[#allocation11 + $0x3c] sm:$0xf]
      %v815 = vld [vmem:[%s7] sm:$0x1]
      %v817 = vlaneseq
      %v818 = vshrl.u32 %v817, 7
      %v819 = vsub.s32 0, %v818
      %v820 = vrot.slane %v815, %v819
      %v838 = vunpack.c.l.b16 %v799
      %v839 = vunpack.c.l.b16 %v800
      %v840 = vunpack.c.l.b16 %v801
      %v841 = vunpack.c.l.b16 %v802
      %v842 = vunpack.c.l.b16 %v803
      %v843 = vunpack.c.l.b16 %v804
      %v844 = vunpack.c.l.b16 %v805
      %v845 = vunpack.c.l.b16 %v806
      %v846 = vunpack.c.l.b16 %v807
      %v847 = vunpack.c.l.b16 %v808
      %v848 = vunpack.c.l.b16 %v809
      %v849 = vunpack.c.l.b16 %v810
      %v850 = vunpack.c.l.b16 %v811
      %v851 = vunpack.c.l.b16 %v812
      %v852 = vunpack.c.l.b16 %v813
      %v853 = vunpack.c.l.b16 %v814
      %v854 = vpack.c.b16 %v839, %v838
      %v855 = vpack.c.b16 %v841, %v840
      %v856 = vpack.c.b16 %v843, %v842
      %v857 = vpack.c.b16 %v845, %v844
      %v858 = vpack.c.b16 %v847, %v846
      %v859 = vpack.c.b16 %v849, %v848
      %v860 = vpack.c.b16 %v851, %v850
      %v861 = vpack.c.b16 %v853, %v852
      %870 = vmatprep.subr.bf16.mxu0 0
      %871 = vmatpush1.bf16.msra.mxu0 %v854
      %872 = vmatprep.subr.bf16.mxu0 0
      %873 = vmatpush1.bf16.msra.mxu0 %v855
      %874 = vmatprep.subr.bf16.mxu0 0
      %875 = vmatpush1.bf16.msra.mxu0 %v856
      %876 = vmatprep.subr.bf16.mxu0 0
      %877 = vmatpush1.bf16.msra.mxu0 %v857
      %878 = vmatprep.subr.bf16.mxu0 0
      %879 = vmatpush1.bf16.msra.mxu0 %v858
      %880 = vmatprep.subr.bf16.mxu0 0
      %881 = vmatpush1.bf16.msra.mxu0 %v859
      %882 = vmatprep.subr.bf16.mxu0 0
      %883 = vmatpush1.bf16.msra.mxu0 %v860
      %884 = vmatprep.subr.bf16.mxu0 0
      %885 = vmatpush1.bf16.msra.mxu0 %v861
      %886 = vmatprep.subr.bf16.mxu0 0
      %887 = vmatpush1.bf16.msra.mxu0 0
      %888 = vmatprep.subr.bf16.mxu0 0
      %889 = vmatpush1.bf16.msra.mxu0 0
      %890 = vmatprep.subr.bf16.mxu0 0
      %891 = vmatpush1.bf16.msra.mxu0 0
      %892 = vmatprep.subr.bf16.mxu0 0
      %893 = vmatpush1.bf16.msra.mxu0 0
      %894 = vmatprep.subr.bf16.mxu0 0
      %895 = vmatpush1.bf16.msra.mxu0 0
      %896 = vmatprep.subr.bf16.mxu0 0
      %897 = vmatpush1.bf16.msra.mxu0 0
      %898 = vmatprep.subr.bf16.mxu0 0
      %899 = vmatpush1.bf16.msra.mxu0 0
      %900 = vmatprep.subr.bf16.mxu0 0
      %901 = vmatpush1.bf16.msra.mxu0 0
      %902 = vmatprep.mubr.bf16.mxu0 0
      %903 = vmatmul.mubr.bf16.gmra.mrb[0].mxu0 %v785
      %v904 = vpop.f32.mrb[0].mxu0
      %v905 = vadd.f32 %v820, %v904
      %v906 = vpop.f32.mrb[0].mxu0
      %v907 = vpop.f32.mrb[0].mxu0
      %v908 = vadd.f32 %v820, %v907
      %v909 = vpop.f32.mrb[0].mxu0
      %910 = vmatprep.mubr.bf16.mxu0 0
      %911 = vmatmul.mubr.bf16.gmra.mrb[0].mxu0 %v786
      %v912 = vpop.f32.mrb[0].mxu0
      %v913 = vadd.f32 %v820, %v912
      %v914 = vpop.f32.mrb[0].mxu0
      %v915 = vpop.f32.mrb[0].mxu0
      %v916 = vadd.f32 %v820, %v915
      %v917 = vpop.f32.mrb[0].mxu0
      %918 = vmatprep.mubr.bf16.mxu0 0
      %919 = vmatmul.mubr.bf16.gmra.mrb[0].mxu0 %v787
      %v920 = vpop.f32.mrb[0].mxu0
      %v921 = vadd.f32 %v820, %v920
      %v922 = vpop.f32.mrb[0].mxu0
      %v923 = vpop.f32.mrb[0].mxu0
      %v924 = vadd.f32 %v820, %v923
      %v925 = vpop.f32.mrb[0].mxu0
      %926 = vmatprep.mubr.bf16.mxu0 0
      %927 = vmatmul.mubr.bf16.gmra.mrb[0].mxu0 %v788
      %v928 = vpop.f32.mrb[0].mxu0
      %v929 = vadd.f32 %v820, %v928
      %v930 = vpop.f32.mrb[0].mxu0
      %v931 = vpop.f32.mrb[0].mxu0
      %v932 = vadd.f32 %v820, %v931
      %v933 = vpop.f32.mrb[0].mxu0
      %934 = vmatprep.mubr.bf16.mxu0 0
      %935 = vmatmul.mubr.bf16.gmra.mrb[0].mxu0 %v789
      %v936 = vpop.f32.mrb[0].mxu0
      %v937 = vadd.f32 %v820, %v936
      %v938 = vpop.f32.mrb[0].mxu0
      %v939 = vpop.f32.mrb[0].mxu0
      %v940 = vadd.f32 %v820, %v939
      %v941 = vpop.f32.mrb[0].mxu0
      %942 = vmatprep.mubr.bf16.mxu0 0
      %943 = vmatmul.mubr.bf16.gmra.mrb[0].mxu0 %v790
      %v944 = vpop.f32.mrb[0].mxu0
      %v945 = vadd.f32 %v820, %v944
      %v946 = vpop.f32.mrb[0].mxu0
      %v947 = vpop.f32.mrb[0].mxu0
      %v948 = vadd.f32 %v820, %v947
      %v949 = vpop.f32.mrb[0].mxu0
      %950 = vmatprep.mubr.bf16.mxu0 0
      %951 = vmatmul.mubr.bf16.gmra.mrb[0].mxu0 %v791
      %v952 = vpop.f32.mrb[0].mxu0
      %v953 = vadd.f32 %v820, %v952
      %v954 = vpop.f32.mrb[0].mxu0
      %v955 = vpop.f32.mrb[0].mxu0
      %v956 = vadd.f32 %v820, %v955
      %v957 = vpop.f32.mrb[0].mxu0
      %958 = vmatprep.mubr.bf16.mxu0 0
      %959 = vmatmul.mubr.bf16.gmra.mrb[0].mxu0 %v792
      %v960 = vpop.f32.mrb[0].mxu0
      %v961 = vadd.f32 %v820, %v960
      %v962 = vpop.f32.mrb[0].mxu0
      %v963 = vpop.f32.mrb[0].mxu0
      %v964 = vadd.f32 %v820, %v963
      %v965 = vpop.f32.mrb[0].mxu0
      %966 = vmatprep.mubr.bf16.mxu0 0
      %967 = vmatmul.mubr.bf16.gmra.mrb[0].mxu0 %v793
      %v968 = vpop.f32.mrb[0].mxu0
      %v969 = vadd.f32 %v820, %v968
      %v970 = vpop.f32.mrb[0].mxu0
      %v971 = vpop.f32.mrb[0].mxu0
      %v972 = vadd.f32 %v820, %v971
      %v973 = vpop.f32.mrb[0].mxu0
      %974 = vmatprep.mubr.bf16.mxu0 0
      %975 = vmatmul.mubr.bf16.gmra.mrb[0].mxu0 %v794
      %v976 = vpop.f32.mrb[0].mxu0
      %v977 = vadd.f32 %v820, %v976
      %v978 = vpop.f32.mrb[0].mxu0
      %v979 = vpop.f32.mrb[0].mxu0
      %v980 = vadd.f32 %v820, %v979
      %v981 = vpop.f32.mrb[0].mxu0
      %982 = vmatprep.mubr.bf16.mxu0 0
      %983 = vmatmul.mubr.bf16.gmra.mrb[0].mxu0 %v795
      %v984 = vpop.f32.mrb[0].mxu0
      %v985 = vadd.f32 %v820, %v984
      %v986 = vpop.f32.mrb[0].mxu0
      %v987 = vpop.f32.mrb[0].mxu0
      %v988 = vadd.f32 %v820, %v987
      %v989 = vpop.f32.mrb[0].mxu0
      %990 = vmatprep.mubr.bf16.mxu0 0
      %991 = vmatmul.mubr.bf16.gmra.mrb[0].mxu0 %v796
      %v992 = vpop.f32.mrb[0].mxu0
      %v993 = vadd.f32 %v820, %v992
      %v994 = vpop.f32.mrb[0].mxu0
      %v995 = vpop.f32.mrb[0].mxu0
      %v996 = vadd.f32 %v820, %v995
      %v997 = vpop.f32.mrb[0].mxu0
      %998 = vmatprep.mubr.bf16.mxu0 0
      %999 = vmatmul.mubr.bf16.gmra.mrb[0].mxu0 %v797
      %v1000 = vpop.f32.mrb[0].mxu0
      %v1001 = vadd.f32 %v820, %v1000
      %v1002 = vpop.f32.mrb[0].mxu0
      %v1003 = vpop.f32.mrb[0].mxu0
      %v1004 = vadd.f32 %v820, %v1003
      %v1005 = vpop.f32.mrb[0].mxu0
      %1006 = vmatprep.mubr.bf16.mxu0 0
      %1007 = vmatmul.mubr.bf16.gmra.mrb[0].mxu0 %v798
      %v1008 = vpop.f32.mrb[0].mxu0
      %v1009 = vadd.f32 %v820, %v1008
      %v1010 = vpop.f32.mrb[0].mxu0
      %v1011 = vpop.f32.mrb[0].mxu0
      %v1012 = vadd.f32 %v820, %v1011
      %v1013 = vpop.f32.mrb[0].mxu0
      %1014 = vdwg.mxu0
      %1015 = vst [vmem:[#allocation12] sm:$0xff] %v905
      %1016 = vst [vmem:[#allocation12 + $0x8] sm:$0xff] %v908
      %1017 = vst [vmem:[#allocation12 + $0x10] sm:$0xff] %v913
      %1018 = vst [vmem:[#allocation12 + $0x18] sm:$0xff] %v916
      %1019 = vst [vmem:[#allocation12 + $0x20] sm:$0xff] %v921
      %1020 = vst [vmem:[#allocation12 + $0x28] sm:$0xff] %v924
      %1021 = vst [vmem:[#allocation12 + $0x30] sm:$0xff] %v929
      %1022 = vst [vmem:[#allocation12 + $0x38] sm:$0xff] %v932
      %1023 = vst [vmem:[#allocation12 + $0x40] sm:$0xff] %v937
      %1024 = vst [vmem:[#allocation12 + $0x48] sm:$0xff] %v940
      %1025 = vst [vmem:[#allocation12 + $0x50] sm:$0xff] %v945
      %1026 = vst [vmem:[#allocation12 + $0x58] sm:$0xff] %v948
      %1027 = vst [vmem:[#allocation12 + $0x60] sm:$0xff] %v953
      %1028 = vst [vmem:[#allocation12 + $0x68] sm:$0xff] %v956
      %1029 = vst [vmem:[#allocation12 + $0x70] sm:$0xff] %v961
      %1030 = vst [vmem:[#allocation12 + $0x78] sm:$0xff] %v964
      %1031 = vst [vmem:[#allocation12 + $0x80] sm:$0xff] %v969
      %1032 = vst [vmem:[#allocation12 + $0x88] sm:$0xff] %v972
      %1033 = vst [vmem:[#allocation12 + $0x90] sm:$0xff] %v977
      %1034 = vst [vmem:[#allocation12 + $0x98] sm:$0xff] %v980
      %1035 = vst [vmem:[#allocation12 + $0xa0] sm:$0xff] %v985
      %1036 = vst [vmem:[#allocation12 + $0xa8] sm:$0xff] %v988
      %1037 = vst [vmem:[#allocation12 + $0xb0] sm:$0xff] %v993
      %1038 = vst [vmem:[#allocation12 + $0xb8] sm:$0xff] %v996
      %1039 = vst [vmem:[#allocation12 + $0xc0] sm:$0xff] %v1001
      %1040 = vst [vmem:[#allocation12 + $0xc8] sm:$0xff] %v1004
      %1041 = vst [vmem:[#allocation12 + $0xd0] sm:$0xff] %v1009
      %1042 = vst [vmem:[#allocation12 + $0xd8] sm:$0xff] %v1012
    $region49: #{tpu_custom_call.1} parent=1 // pred_fallthru
      _
    // Predicated region
    $region50: #{tpu_custom_call.1} parent=1 // pred_check
      _
    $region51: #{tpu_custom_call.1} parent=1 // pred_check_branch
      %1044 = sbr.rel (0) target = $region53
    $region52: #{tpu_custom_call.1} parent=1 // pred_region
      %s1046 = ssub.s32 3584, 3584
      %1047 = vsyncadd [#allocation8], %s1046
      %s1048 = sshll.u32 [#allocation12], 4
      %s1049 = int_to_ptr.vmem [resolvable:$true] %s1048
      %1054 = dma.vmem_to_hbm [thread:$0]  %s1049, 3584, %s8, [#allocation8], 128, 128, 8
    $region53: #{tpu_custom_call.1} parent=1 // pred_fallthru
      _
    // Predicated region
    $region54: #{tpu_custom_call.1} parent=1 // pred_check
      _
    $region55: #{tpu_custom_call.1} parent=1 // pred_check_branch
      %1056 = sbr.rel (0) target = $region57
    $region56: #{tpu_custom_call.1} parent=1 // pred_region
      %1057 = dma.done [#allocation8], 3584
    $region57: #{tpu_custom_call.1} parent=1 // pred_fallthru
      _
    %1058 = vsyncpa [#allocation7], 1
    %1059 = vsyncpa [#allocation10], 1
    %1060 = vsyncpa [#allocation8], 1

</llo_original>
